<compile_context>
chip_gen: v5e
topology: v5e:2x2
jax: 0.10.0
libtpu: 0.0.40
codegen_flags: <defaults>
</compile_context>

<pallas_src>
import jax
import jax.numpy as jnp
from jax import lax
from jax.experimental import pallas as pl
from jax.experimental.pallas import tpu as pltpu

LATENT = 64
HIDDEN = LATENT // 2  # 32


def _costnet_kernel(x_ref, w1_ref, b1_ref, w2_ref, b2_ref, o_ref):
    # Layer 1 (+ folded eval-mode BN): (tb, D) @ (D, H) on the MXU, f32 accum.
    h = jnp.dot(x_ref[...], w1_ref[...], preferred_element_type=jnp.float32)
    h = jnp.maximum(h + b1_ref[...], 0.0)  # bias + ReLU on the VPU (f32)

    # Layer 2, emitted LANE-DENSE: contract H between w2 (1, H) and h (tb, H)
    # -> (1, tb) row (same contraction pattern as 'bqd,bkd->bqk' attention).
    y = lax.dot_general(
        w2_ref[...], h,
        dimension_numbers=(((1,), (1,)), ((), ())),
        preferred_element_type=jnp.float32,
    ) + b2_ref[...]                                              # (1, tb)

    # Sigmoid: exp goes to the EUP slot; the divide touches only tb/1024 vregs.
    o_ref[...] = 1.0 / (1.0 + jnp.exp(-y))


def _round_up(n, m):
    return ((n + m - 1) // m) * m


def costnet_forward(x, params, *, tb=4096, training=False):
    """CostNet forward (inference).  x: (B, LATENT) -> (B, 1) float32.

    `x` may be float32 or bfloat16; bfloat16 halves the dominant HBM read.
    """
    if training:
        # TODO(synk): training-mode BatchNorm1d (batch statistics + running-stat
        # updates) is not implemented in the kernel; eval-mode BN is folded.
        raise NotImplementedError("CostNet Pallas kernel implements eval-mode BN only.")

    B, D = x.shape
    assert D == LATENT
    if x.dtype not in (jnp.float32, jnp.bfloat16):
        x = x.astype(jnp.float32)
    x_dtype = x.dtype

    # Fold eval-mode BatchNorm1d into the first Linear:
    #   BN(x@W1 + b1) = x@(W1*s) + ((b1 - mean)*s + beta),  s = gamma * rsqrt(var + eps)
    s = params["bn_gamma"] * lax.rsqrt(params["bn_var"] + params["bn_eps"])
    w1 = (params["w1"] * s[None, :]).astype(x_dtype)                      # (D, H), matches x dtype for the MXU
    b1 = ((params["b1"] - params["bn_mean"]) * s
          + params["bn_beta"]).reshape(1, HIDDEN).astype(jnp.float32)     # (1, H)
    w2 = params["w2"].reshape(1, HIDDEN).astype(jnp.float32)              # (1, H) row
    b2 = params["b2"].reshape(1, 1).astype(jnp.float32)                   # (1, 1)

    # Batch tiling: tb rows per grid step.  No jnp.pad of x -- use a cdiv grid
    # and let Pallas handle the ragged last tile.  tb must be a multiple of 8
    # (x block sublane dim); when the grid has >1 step the lane-dense (1, tb)
    # output block additionally needs tb to be a multiple of 128.
    tb = max(8, min(int(tb), _round_up(B, 8)))
    tb = _round_up(tb, 8)
    grid_n = pl.cdiv(B, tb)
    if grid_n > 1:
        tb = _round_up(tb, 128)
        grid_n = pl.cdiv(B, tb)
    Bp = grid_n * tb

    out = pl.pallas_call(
        _costnet_kernel,
        out_shape=jax.ShapeDtypeStruct((1, Bp), jnp.float32),
        grid_spec=pltpu.PrefetchScalarGridSpec(
            num_scalar_prefetch=0,
            grid=(grid_n,),
            in_specs=[
                pl.BlockSpec((tb, D), lambda i: (i, 0)),        # x tile (pipelined; last tile ragged)
                pl.BlockSpec((D, HIDDEN), lambda i: (0, 0)),    # w1: VMEM-resident
                pl.BlockSpec((1, HIDDEN), lambda i: (0, 0)),    # b1: VMEM-resident
                pl.BlockSpec((1, HIDDEN), lambda i: (0, 0)),    # w2 row: VMEM-resident
                pl.BlockSpec((1, 1), lambda i: (0, 0)),         # b2: VMEM-resident
            ],
            out_specs=pl.BlockSpec((1, tb), lambda i: (0, i)),  # lane-dense row per step
        ),
        compiler_params=pltpu.CompilerParams(
            dimension_semantics=("parallel",)),
    )(x, w1, b1, w2, b2)

    # Padded columns (rows B..Bp) are dropped; output is tiny so this is free.
    return out[0, :B][:, None]


def init_params(key):
    ks = jax.random.split(key, 8)
    return {
        # Linear weights stored transposed vs. PyTorch: (in_features, out_features)
        "w1": jax.random.normal(ks[0], (LATENT, HIDDEN), jnp.float32) * 0.1,
        "b1": jax.random.normal(ks[1], (HIDDEN,), jnp.float32) * 0.1,
        # eval-mode BatchNorm1d(HIDDEN) parameters / running stats
        "bn_gamma": 1.0 + 0.1 * jax.random.normal(ks[2], (HIDDEN,), jnp.float32),
        "bn_beta": 0.1 * jax.random.normal(ks[3], (HIDDEN,), jnp.float32),
        "bn_mean": 0.1 * jax.random.normal(ks[4], (HIDDEN,), jnp.float32),
        "bn_var": jnp.abs(jax.random.normal(ks[5], (HIDDEN,), jnp.float32)) + 0.5,
        "bn_eps": 1e-5,
        "w2": jax.random.normal(ks[6], (HIDDEN, 1), jnp.float32) * 0.1,
        "b2": jax.random.normal(ks[7], (1,), jnp.float32) * 0.1,
    }


def _reference_forward(x, p):
    # Pure-JAX reference (unfolded BN, eval mode) for correctness checking.
    x = x.astype(jnp.float32)
    h = x @ p["w1"] + p["b1"]
    h = (h - p["bn_mean"]) / jnp.sqrt(p["bn_var"] + p["bn_eps"]) * p["bn_gamma"] + p["bn_beta"]
    h = jnp.maximum(h, 0.0)
    y = h @ p["w2"] + p["b2"]
    return 1.0 / (1.0 + jnp.exp(-y))


if __name__ == "__main__":
    key = jax.random.PRNGKey(0)
    k_x, k_p = jax.random.split(key)
    params = init_params(k_p)

    # Small shape consistent with the module: batch=30 (not a multiple of 8), latent=64.
    B = 30
    x = jax.random.normal(k_x, (B, LATENT), jnp.float32)
    ref = _reference_forward(x, params)

    # f32 path (single-block grid, ragged rows handled without any jnp.pad).
    out = jax.block_until_ready(costnet_forward(x, params))
    assert out.shape == (B, 1)
    assert jnp.allclose(out, ref, atol=1e-5, rtol=1e-5)

    # bf16 activations (recommended production path: x is ~98% of HBM traffic).
    out_bf16 = jax.block_until_ready(costnet_forward(x.astype(jnp.bfloat16), params))
    assert out_bf16.shape == (B, 1)
    assert jnp.allclose(out_bf16, ref, atol=2e-2)

    # Multi-step grid with a ragged last tile (grid = cdiv(300,128) = 3, no padding copy).
    x2 = jax.random.normal(k_x, (300, LATENT), jnp.float32)
    out2 = jax.block_until_ready(costnet_forward(x2, params, tb=128))
    ref2 = _reference_forward(x2, params)
    assert out2.shape == (300, 1)
    assert jnp.allclose(out2, ref2, atol=1e-5, rtol=1e-5)

    print("KERNEL_OK")
</pallas_src>

<mosaic_0001>
module attributes {stable_mosaic.version = 11 : i64} {
  func.func @_costnet_kernel(%arg0: i32, %arg1: memref<32x64xf32, #tpu.memory_space<vmem>>, %arg2: memref<64x32xf32, #tpu.memory_space<vmem>>, %arg3: memref<1x32xf32, #tpu.memory_space<vmem>>, %arg4: memref<1x32xf32, #tpu.memory_space<vmem>>, %arg5: memref<1x1xf32, #tpu.memory_space<vmem>>, %arg6: memref<1x32xf32, #tpu.memory_space<vmem>>) attributes {dimension_semantics = [#tpu.dimension_semantics<parallel>], iteration_bounds = array<i64: 1>, scalar_prefetch = 0 : i64, scratch_operands = 0 : i64, tpu.core_type = #tpu.core_type<tc>, window_params = [{transform_indices = @transform_0, window_bounds = array<i64: 32, 64>}, {pipeline_mode = #tpu.pipeline_mode<synchronous>, transform_indices = @transform_1, window_bounds = array<i64: 64, 32>}, {pipeline_mode = #tpu.pipeline_mode<synchronous>, transform_indices = @transform_2, window_bounds = array<i64: 1, 32>}, {pipeline_mode = #tpu.pipeline_mode<synchronous>, transform_indices = @transform_3, window_bounds = array<i64: 1, 32>}, {pipeline_mode = #tpu.pipeline_mode<synchronous>, transform_indices = @transform_4, window_bounds = array<i64: 1, 1>}, {transform_indices = @transform_5, window_bounds = array<i64: 1, 32>}]} {
    %c0 = arith.constant 0 : index
    %c0_0 = arith.constant 0 : index
    %0 = vector.load %arg1[%c0, %c0_0] : memref<32x64xf32, #tpu.memory_space<vmem>>, vector<32x64xf32>
    %c0_1 = arith.constant 0 : index
    %c0_2 = arith.constant 0 : index
    %1 = vector.load %arg2[%c0_1, %c0_2] : memref<64x32xf32, #tpu.memory_space<vmem>>, vector<64x32xf32>
    %cst = arith.constant dense<0.000000e+00> : vector<32x32xf32>
    %2 = tpu.matmul %0, %1, %cst {dimension_numbers = #tpu.dot_dimension_numbers<[1], [0], [0], [1], [0, 0, 1, 1], [], []>} : vector<32x64xf32>, vector<64x32xf32>, vector<32x32xf32> -> vector<32x32xf32>
    %c0_3 = arith.constant 0 : index
    %c0_4 = arith.constant 0 : index
    %3 = vector.load %arg3[%c0_3, %c0_4] : memref<1x32xf32, #tpu.memory_space<vmem>>, vector<1x32xf32>
    %4 = vector.broadcast %3 : vector<1x32xf32> to vector<32x32xf32>
    %5 = arith.addf %2, %4 : vector<32x32xf32>
    %cst_5 = arith.constant 0.000000e+00 : f32
    %6 = vector.broadcast %cst_5 : f32 to vector<32x32xf32>
    %7 = arith.maximumf %5, %6 : vector<32x32xf32>
    %c0_6 = arith.constant 0 : index
    %c0_7 = arith.constant 0 : index
    %8 = vector.load %arg4[%c0_6, %c0_7] : memref<1x32xf32, #tpu.memory_space<vmem>>, vector<1x32xf32>
    %cst_8 = arith.constant dense<0.000000e+00> : vector<1x32xf32>
    %9 = tpu.matmul %8, %7, %cst_8 {dimension_numbers = #tpu.dot_dimension_numbers<[1], [1], [0], [0], [0, 0, 1, 0], [], []>} : vector<1x32xf32>, vector<32x32xf32>, vector<1x32xf32> -> vector<1x32xf32>
    %c0_9 = arith.constant 0 : index
    %c0_10 = arith.constant 0 : index
    %10 = vector.load %arg5[%c0_9, %c0_10] : memref<1x1xf32, #tpu.memory_space<vmem>>, vector<1x1xf32>
    %11 = vector.broadcast %10 : vector<1x1xf32> to vector<1x32xf32>
    %12 = arith.addf %9, %11 : vector<1x32xf32>
    %cst_11 = arith.constant 0.000000e+00 : f32
    %13 = vector.broadcast %cst_11 : f32 to vector<1x32xf32>
    %14 = arith.subf %13, %12 : vector<1x32xf32>
    %15 = math.exp %14 : vector<1x32xf32>
    %cst_12 = arith.constant 1.000000e+00 : f32
    %16 = vector.broadcast %cst_12 : f32 to vector<1x32xf32>
    %17 = arith.addf %16, %15 : vector<1x32xf32>
    %cst_13 = arith.constant 1.000000e+00 : f32
    %18 = vector.broadcast %cst_13 : f32 to vector<1x32xf32>
    %19 = arith.divf %18, %17 : vector<1x32xf32>
    %c0_14 = arith.constant 0 : index
    %c0_15 = arith.constant 0 : index
    %20 = vector.load %arg6[%c0_14, %c0_15] : memref<1x32xf32, #tpu.memory_space<vmem>>, vector<1x32xf32>
    tpu.vector_store %arg6[%c0_14, %c0_15], %19 {strides = array<i32>} : memref<1x32xf32, #tpu.memory_space<vmem>>, vector<1x32xf32>,
    return
  }
  func.func @transform_0(%arg0: i32) -> (i32, i32) {
    %c0_i32 = arith.constant 0 : i32
    %c0_i32_0 = arith.constant 0 : i32
    return %arg0, %c0_i32 : i32, i32
  }
  func.func @transform_1(%arg0: i32) -> (i32, i32) {
    %c0_i32 = arith.constant 0 : i32
    %c0_i32_0 = arith.constant 0 : i32
    %c0_i32_1 = arith.constant 0 : i32
    return %c0_i32, %c0_i32_0 : i32, i32
  }
  func.func @transform_2(%arg0: i32) -> (i32, i32) {
    %c0_i32 = arith.constant 0 : i32
    %c0_i32_0 = arith.constant 0 : i32
    %c0_i32_1 = arith.constant 0 : i32
    return %c0_i32, %c0_i32_0 : i32, i32
  }
  func.func @transform_3(%arg0: i32) -> (i32, i32) {
    %c0_i32 = arith.constant 0 : i32
    %c0_i32_0 = arith.constant 0 : i32
    %c0_i32_1 = arith.constant 0 : i32
    return %c0_i32, %c0_i32_0 : i32, i32
  }
  func.func @transform_4(%arg0: i32) -> (i32, i32) {
    %c0_i32 = arith.constant 0 : i32
    %c0_i32_0 = arith.constant 0 : i32
    %c0_i32_1 = arith.constant 0 : i32
    return %c0_i32, %c0_i32_0 : i32, i32
  }
  func.func @transform_5(%arg0: i32) -> (i32, i32) {
    %c0_i32 = arith.constant 0 : i32
    %c0_i32_0 = arith.constant 0 : i32
    return %c0_i32, %arg0 : i32, i32
  }
}

</mosaic_0001>

<llo_original>
// kernel: tpu_custom_call.1
$region0: #{tpu_custom_call.1}
  #allocation0 [shape = 'u32[]', space=smem, size = 0x4, offset = 0x4, fixed_abs, tag = 'smem constant byte address 0x4 - core index']
  #allocation1 [shape = 'u32[72,128]{1,0:T(1,128)}', space=vmem, size = 0x9000, scoped, tag = 'internal scratch']
  #allocation2 [shape = 'f32[1,1]{1,0:T(1,128)S(1)}', space=vmem, size = 0x200, scoped, tag = 'scoped memory for tpu_custom_call.1']
  %s0 = inlined_call_operand.vmem [shape: f32[30,64], index: 0, kind: input, shape index: {}]
  %s1 = inlined_call_operand.vmem [shape: f32[64,32], index: 1, kind: input, shape index: {}]
  %s2 = inlined_call_operand.vmem [shape: f32[1,32], index: 2, kind: input, shape index: {}]
  %s3 = inlined_call_operand.vmem [shape: f32[1,32], index: 3, kind: input, shape index: {}]
  %s4 = inlined_call_operand.<no memory space> [shape: f32[1,1], index: 4, kind: input, shape index: {}]
  %s5 = inlined_call_operand.hbm [shape: f32[1,32], index: 5, kind: output, shape index: {}]
  %s6 = sld [smem:[#allocation0]]
  $region30: #{tpu_custom_call.1} parent=0
    _
  %s8 = ssub.s32 1, %s6
  %s9 = scalar_select 0, %s8, %s6
  %v10 = vstv %s4
  %11 = vst [vmem:[#allocation2] sm:$0x1] %v10
  $region1: #{tpu_custom_call.1} parent=0
    #allocation3 [shape = 'u8[512]{0}', space=vmem, size = 0x400, scoped, tag = 'output window, operand 0, single buffered']
    #allocation4 [shape = 's32[1]{0}', space=sflag, size = 0x4, scoped, tag = 'scoped memory for tpu_custom_call.1']
    %12 = vsyncpa [#allocation4], 0
    // Predicated region
    $region2: #{tpu_custom_call.1} parent=1 // pred_check
      _
    $region3: #{tpu_custom_call.1} parent=1 // pred_check_branch
      %14 = sbr.rel (0) target = $region5
    $region4: #{tpu_custom_call.1} parent=1 // pred_region
      _
    $region5: #{tpu_custom_call.1} parent=1 // pred_fallthru
      _
    // Predicated region
    $region6: #{tpu_custom_call.1} parent=1 // pred_check
      _
    $region7: #{tpu_custom_call.1} parent=1 // pred_check_branch
      %16 = sbr.rel (0) target = $region9
    $region8: #{tpu_custom_call.1} parent=1 // pred_region
      _
    $region9: #{tpu_custom_call.1} parent=1 // pred_fallthru
      _
    // Predicated region
    $region10: #{tpu_custom_call.1} parent=1 // pred_check
      _
    $region11: #{tpu_custom_call.1} parent=1 // pred_check_branch
      %18 = sbr.rel (0) target = $region13
    $region12: #{tpu_custom_call.1} parent=1 // pred_region
      _
    $region13: #{tpu_custom_call.1} parent=1 // pred_fallthru
      _
    // Predicated region
    $region14: #{tpu_custom_call.1} parent=1 // pred_check
      _
    $region15: #{tpu_custom_call.1} parent=1 // pred_check_branch
      %20 = sbr.rel (0) target = $region17
    $region16: #{tpu_custom_call.1} parent=1 // pred_region
      _
    $region17: #{tpu_custom_call.1} parent=1 // pred_fallthru
      _
    // Predicated region
    $region18: #{tpu_custom_call.1} parent=1 // pred_check
      _
    $region19: #{tpu_custom_call.1} parent=1 // pred_check_branch
      %22 = sbr.rel (0) target = $region21
    $region20: #{tpu_custom_call.1} parent=1 // pred_region
      _
    $region21: #{tpu_custom_call.1} parent=1 // pred_fallthru
      _
    %v23 = vld [vmem:[%s0] sm:$0xff]
    %v24 = vld [vmem:[%s0 + $0x8] sm:$0xff]
    %v25 = vld [vmem:[%s0 + $0x10] sm:$0xff]
    %v26 = vld [vmem:[%s0 + $0x18] sm:$0xff]
    %v27 = vld [vmem:[%s1] sm:$0xff]
    %v28 = vld [vmem:[%s1 + $0x8] sm:$0xff]
    %v29 = vld [vmem:[%s1 + $0x10] sm:$0xff]
    %v30 = vld [vmem:[%s1 + $0x18] sm:$0xff]
    %v31 = vld [vmem:[%s1 + $0x20] sm:$0xff]
    %v32 = vld [vmem:[%s1 + $0x28] sm:$0xff]
    %v33 = vld [vmem:[%s1 + $0x30] sm:$0xff]
    %v34 = vld [vmem:[%s1 + $0x38] sm:$0xff]
    %v35 = vld [vmem:[%s2] sm:$0x1]
    %v37 = vperm.slane %v35, 0
    %vm39 = vcmask 523264
    %v41 = vsel %vm39, %v23, 0
    %v44 = vsel %vm39, %v24, 0
    %v47 = vsel %vm39, %v25, 0
    %v50 = vsel %vm39, %v26, 0
    %52 = vmatpush.msra.mxu0 0.0
    %53 = vmatpush.msra.mxu0 0.0
    %54 = vmatpush.msra.mxu0 0.0
    %55 = vmatpush.msra.mxu0 0.0
    %56 = vmatpush.msra.mxu0 0.0
    %57 = vmatpush.msra.mxu0 0.0
    %58 = vmatpush.msra.mxu0 0.0
    %59 = vmatpush.msra.mxu0 0.0
    %60 = vmatpush.msra.mxu0 %v34
    %61 = vmatpush.msra.mxu0 %v33
    %62 = vmatpush.msra.mxu0 %v32
    %63 = vmatpush.msra.mxu0 %v31
    %64 = vmatpush.msra.mxu0 %v30
    %65 = vmatpush.msra.mxu0 %v29
    %66 = vmatpush.msra.mxu0 %v28
    %67 = vmatpush.msra.mxu0 %v27
    %68 = vmatmul.f32.gmra.mxu0 %v41
    %v69 = vpop.f32.mrf.mxu0
    %v70 = vadd.f32 %v37, %v69
    %71 = vmatmul.f32.gmra.mxu0 %v44
    %v72 = vpop.f32.mrf.mxu0
    %v73 = vadd.f32 %v37, %v72
    %74 = vmatmul.f32.gmra.mxu0 %v47
    %v75 = vpop.f32.mrf.mxu0
    %v76 = vadd.f32 %v37, %v75
    %77 = vmatmul.f32.gmra.mxu0 %v50
    %v78 = vpop.f32.mrf.mxu0
    %v79 = vadd.f32 %v37, %v78
    %80 = vdwg.mxu0
    %v81 = vmax.f32 %v70, 0.0
    %v82 = vmax.f32 %v73, 0.0
    %v83 = vmax.f32 %v76, 0.0
    %v84 = vmax.f32 %v79, 0.0
    %v85 = vld [vmem:[%s3] sm:$0x1]
    %v86 = vld [vmem:[#allocation2] sm:$0x1]
    %88 = vset.pattern.permute.xlu0 0
    %89 = vperm.xlu0 %88, %v86
    %v90 = vpop.permute.xlu0 %89
    %v92 = vperm.slane %v90, 0
    %vm93 = vcmask 261120
    %v95 = vsel %vm93, %v85, 0
    %v98 = vsel %vm93, %v81, 0
    %v101 = vsel %vm93, %v82, 0
    %v104 = vsel %vm93, %v83, 0
    %v107 = vsel %vm93, %v84, 0
    %109 = vmatpush.xpose.msra.mxu0 0.0
    %110 = vmatpush.xpose.msra.mxu0 0.0
    %111 = vmatpush.xpose.msra.mxu0 0.0
    %112 = vmatpush.xpose.msra.mxu0 0.0
    %113 = vmatpush.xpose.msra.mxu0 0.0
    %114 = vmatpush.xpose.msra.mxu0 0.0
    %115 = vmatpush.xpose.msra.mxu0 0.0
    %116 = vmatpush.xpose.msra.mxu0 0.0
    %117 = vmatpush.xpose.msra.mxu0 0.0
    %118 = vmatpush.xpose.msra.mxu0 0.0
    %119 = vmatpush.xpose.msra.mxu0 0.0
    %120 = vmatpush.xpose.msra.mxu0 0.0
    %121 = vmatpush.xpose.msra.mxu0 %v107
    %122 = vmatpush.xpose.msra.mxu0 %v104
    %123 = vmatpush.xpose.msra.mxu0 %v101
    %124 = vmatpush.xpose.msra.mxu0 %v98
    %125 = vmatmul.f32.gmra.mxu0 %v95
    %v126 = vpop.f32.mrf.mxu0
    %v127 = vadd.f32 %v92, %v126
    %128 = vdwg.mxu0
    %v129 = vsub.f32 0.0, %v127
    %v130 = vmul.f32 %v129, 1.442695
    %v131 = vpow.pop %v130
    %v132 = vadd.f32 %v131, 1.0
    %v133 = vrcp.pop %v132
    %v134 = vmul.f32 %v132, %v133
    %v135 = vsub.f32 1.0, %v134
    %v136 = vmul.f32 %v133, %v135
    %v137 = vadd.f32 %v133, %v136
    %vm138 = vweird.f32 %v132
    %vm139 = vweird.f32 %v133
    %vm140 = vmor %vm138, %vm139
    %v141 = vsel %vm140, %v133, %v137
    %v142 = vand.u32 2147483647, %v132
    %vm143 = vcmp.eq.f32.partialorder %v142, 8.507059e+37
    %v144 = vand.u32 %v132, 2147483648
    %v145 = vor.u32 1.1754944e-38, %v144
    %v146 = vsel %vm143, %v145, %v141
    %v147 = vmul.f32 1.0, %v146
    %vm148 = vcmask 253952
    %149 = vst.msk [vmem:[#allocation3] sm:$0x1] %vm148, %v147
    // Predicated region
    $region22: #{tpu_custom_call.1} parent=1 // pred_check
      _
    $region23: #{tpu_custom_call.1} parent=1 // pred_check_branch
      %151 = sbr.rel (0) target = $region25
    $region24: #{tpu_custom_call.1} parent=1 // pred_region
      %153 = vsyncadd [#allocation4], 0
      %s155 = sshll.u32 [#allocation3], 4
      %s156 = int_to_ptr.vmem [resolvable:$true] %s155
      %s157 = sshll.u32 %s5, 4
      %s158 = int_to_ptr.hbm [resolvable:$true] %s157
      %160 = dma.vmem_to_hbm [thread:$0]  %s156, 16, %s158, [#allocation4]
    $region25: #{tpu_custom_call.1} parent=1 // pred_fallthru
      _
    // Predicated region
    $region26: #{tpu_custom_call.1} parent=1 // pred_check
      _
    $region27: #{tpu_custom_call.1} parent=1 // pred_check_branch
      %162 = sbr.rel (0) target = $region29
    $region28: #{tpu_custom_call.1} parent=1 // pred_region
      %164 = dma.done [#allocation4], 16
    $region29: #{tpu_custom_call.1} parent=1 // pred_fallthru
      _
    %165 = vsyncpa [#allocation4], 1

</llo_original>
